<compile_context>
chip_gen: v7x
topology: tpu7x:2x2x1
jax: 0.10.0
libtpu: 0.0.40
codegen_flags: <defaults>
</compile_context>

<pallas_src>
from functools import partial

import jax
import jax.numpy as jnp
from jax import lax
from jax.experimental import pallas as pl
from jax.experimental.pallas import tpu as pltpu

EPS = 1e-12


def posterior_converter_kernel(x_ref, w12_ref, b12_ref, gamma_ref, beta_ref,
                               fcw_ref, fcb_ref, o_ref, carry_ref,
                               *, eps, n_ch, t_real):
    t_idx = pl.program_id(1)

    # reset the running cLN stats carry at the start of each batch element
    @pl.when(t_idx == 0)
    def _():
        carry_ref[...] = jnp.zeros_like(carry_ref)

    x = x_ref[0]                                   # (Cin, tT), lanes = time
    tT = x.shape[-1]

    # folded conv1 + conv2 (1x1 convs == channel matmul), channels-first
    h = jnp.dot(w12_ref[...], x, preferred_element_type=jnp.float32) + b12_ref[...]
    # TODO(synk): training-mode dropout between conv2 and cLN not implemented
    # (identity at inference).

    # per-timestep channel stats, stacked into a single (2, tT) tensor (same
    # vreg footprint as one row) so the prefix scan below is shared.
    step_sum = jnp.sum(h, axis=0, keepdims=True)             # (1, tT)
    step_sq = jnp.sum(h * h, axis=0, keepdims=True)          # (1, tT)
    row = lax.broadcasted_iota(jnp.int32, (2, tT), 0)
    stats = jnp.where(row == 0, step_sum, step_sq)           # (2, tT)

    # global time position of every lane; padded tail positions contribute
    # nothing to the cumulative statistics (keeps the cross-tile carry exact).
    lane = lax.broadcasted_iota(jnp.int32, (1, tT), 1)
    pos = lane + t_idx * tT
    stats = stats * (pos < t_real).astype(jnp.float32)

    # fused inclusive prefix sums over the tile: Hillis-Steele doubling scan
    # (pltpu.roll on the XLU + masked VALU adds).  log2(tT) steps, O(tT) work,
    # constant VMEM -- replaces the O(tT^2) triangular matmul of v2.
    shift = 1
    while shift < tT:
        rolled = pltpu.roll(stats, shift=shift, axis=1)
        stats = stats + rolled * (lane >= shift).astype(jnp.float32)
        shift *= 2

    # add the carry from previous T tiles of this batch element; the new carry
    # is just the last column of the carried inclusive prefix (no extra
    # cross-lane reduction).
    cum = stats + carry_ref[...]                             # (2, tT)
    carry_ref[...] = cum[:, -1:]

    cum_sum = cum[0:1, :]                                    # (1, tT)
    cum_sq = cum[1:2, :]                                     # (1, tT)

    # cumulative layer norm (stats over channels, cumulative over global time)
    inv_num = 1.0 / ((pos + 1).astype(jnp.float32) * n_ch)   # (1, tT)
    cum_mean = cum_sum * inv_num
    cum_var = jnp.maximum(cum_sq * inv_num - cum_mean * cum_mean, 0.0)
    inv_std = 1.0 / (jnp.sqrt(cum_var) + eps)                # (1, tT)
    hn = (h - cum_mean) * inv_std * gamma_ref[...] + beta_ref[...]

    # fc over the channel dim
    y = jnp.dot(fcw_ref[...], hn, preferred_element_type=jnp.float32) + fcb_ref[...]

    # softmax over the channel dim (sublane axis)
    m = jnp.max(y, axis=0, keepdims=True)
    e = jnp.exp(y - m)
    s = jnp.sum(e, axis=0, keepdims=True)
    o_ref[0] = (e * pl.reciprocal(s, approx=True)).astype(o_ref.dtype)


def posterior_converter(x_nchw, params, eps=EPS, tile_t=4096):
    B, Cin, H, W = x_nchw.shape
    T = H * W
    Cout = params["w1"].shape[1]

    # NCHW -> channels-first (B, Cin, T): pure reshape, no HBM transpose.
    x = x_nchw.reshape(B, Cin, T)

    # lane tile over T (multiple of 128); pad T up to a tile multiple.
    tT = max(128, min((tile_t // 128) * 128, ((T + 127) // 128) * 128))
    nT = -(-T // tT)
    Tp = nT * tT
    if Tp != T:
        x = jnp.pad(x, ((0, 0), (0, 0), (0, Tp - T)))

    # fold conv1 + conv2; store per-channel params as (Cout, 1) columns
    w12 = (params["w1"] @ params["w2"]).T                        # (Cout, Cin)
    b12 = (params["b1"] @ params["w2"] + params["b2"]).reshape(Cout, 1)
    gamma = params["gamma"].reshape(Cout, 1)
    beta = params["beta"].reshape(Cout, 1)
    fcw = params["fcw"].T                                        # (Cout, Cout) = (out, in)
    fcb = params["fcb"].reshape(Cout, 1)

    scan_steps = max(1, tT.bit_length() - 1)
    cost = pl.CostEstimate(
        flops=2 * B * Tp * (Cin * Cout + Cout * Cout)
              + B * Tp * (4 * scan_steps + 12 * Cout),
        transcendentals=B * Tp * (Cout + 2),
        bytes_accessed=4 * (B * Tp * (Cin + Cout) + Cout * (Cin + Cout + 4)),
    )

    kern = partial(posterior_converter_kernel, eps=eps, n_ch=float(Cout), t_real=T)
    out = pl.pallas_call(
        kern,
        out_shape=jax.ShapeDtypeStruct((B, Cout, Tp), x.dtype),
        grid_spec=pltpu.PrefetchScalarGridSpec(
            num_scalar_prefetch=0,
            grid=(B, nT),
            in_specs=[
                pl.BlockSpec((1, Cin, tT), lambda b, t: (b, 0, t)),   # x tile
                pl.BlockSpec((Cout, Cin), lambda b, t: (0, 0)),       # folded conv weight
                pl.BlockSpec((Cout, 1), lambda b, t: (0, 0)),         # folded conv bias
                pl.BlockSpec((Cout, 1), lambda b, t: (0, 0)),         # cLN gamma
                pl.BlockSpec((Cout, 1), lambda b, t: (0, 0)),         # cLN beta
                pl.BlockSpec((Cout, Cout), lambda b, t: (0, 0)),      # fc weight (out, in)
                pl.BlockSpec((Cout, 1), lambda b, t: (0, 0)),         # fc bias
            ],
            out_specs=pl.BlockSpec((1, Cout, tT), lambda b, t: (b, 0, t)),
            scratch_shapes=[pltpu.VMEM((2, 1), jnp.float32)],         # [sum; sumsq] carry
        ),
        compiler_params=pltpu.CompilerParams(
            dimension_semantics=("parallel", "arbitrary"),
            vmem_limit_bytes=32 * 1024 * 1024,
        ),
        cost_estimate=cost,
    )(x, w12, b12, gamma, beta, fcw, fcb)

    if Tp != T:
        out = out[:, :, :T]
    return out.reshape(B, Cout, H, W)


def reference(x_nchw, params, eps=EPS):
    """Pure-JAX reference mirroring the PyTorch forward."""
    B, Cin, H, W = x_nchw.shape
    T = H * W
    x = jnp.transpose(x_nchw.reshape(B, Cin, T), (0, 2, 1))      # (B, T, Cin)
    h = x @ params["w1"] + params["b1"]
    h = h @ params["w2"] + params["b2"]
    C = h.shape[-1]
    step_sum = h.sum(-1)                                          # (B, T)
    step_sq = (h * h).sum(-1)
    cum_sum = jnp.cumsum(step_sum, axis=1)
    cum_sq = jnp.cumsum(step_sq, axis=1)
    cum_num = (jnp.arange(T, dtype=jnp.float32) + 1.0) * C
    cum_mean = cum_sum / cum_num
    cum_var = cum_sq / cum_num - cum_mean ** 2
    hn = ((h - cum_mean[..., None]) / (jnp.sqrt(cum_var)[..., None] + eps)
          * params["gamma"] + params["beta"])
    y = hn @ params["fcw"] + params["fcb"]
    y = jax.nn.softmax(y, axis=-1)
    return jnp.transpose(y, (0, 2, 1)).reshape(B, C, H, W)


def init_params(key, in_feat, out_feat):
    k1, k2, k3, kb1, kb2, kb3 = jax.random.split(key, 6)
    scale = 0.3
    return {
        # conv1 weight (Cout, Cin, 1, 1) stored directly as matmul layout (Cin, Cout)
        "w1": scale * jax.random.normal(k1, (in_feat, out_feat), jnp.float32),
        "b1": scale * jax.random.normal(kb1, (1, out_feat), jnp.float32),
        "w2": scale * jax.random.normal(k2, (out_feat, out_feat), jnp.float32),
        "b2": scale * jax.random.normal(kb2, (1, out_feat), jnp.float32),
        # cLN parameters default-initialized as in PyTorch (gamma=1, beta=0)
        "gamma": jnp.ones((1, out_feat), jnp.float32),
        "beta": jnp.zeros((1, out_feat), jnp.float32),
        # fc weight stored as W^T: (in, out)
        "fcw": scale * jax.random.normal(k3, (out_feat, out_feat), jnp.float32),
        "fcb": scale * jax.random.normal(kb3, (1, out_feat), jnp.float32),
    }


if __name__ == "__main__":
    key = jax.random.PRNGKey(0)
    kx, kp = jax.random.split(key)

    B, in_feat, out_feat = 2, 6, 8
    params = init_params(kp, in_feat, out_feat)

    # case 1: T = 16*16 = 256 with tile_t=128 -> 2 T-tiles per batch element,
    # exercising the cross-tile cLN carry.
    H, W = 16, 16
    x = jax.random.normal(kx, (B, in_feat, H, W), jnp.float32)
    out = jax.block_until_ready(posterior_converter(x, params, tile_t=128))
    ref = jax.block_until_ready(reference(x, params))
    assert out.shape == (B, out_feat, H, W)
    assert jnp.allclose(out, ref, atol=2e-3, rtol=2e-3), "mismatch vs reference (tiled)"

    # case 2: T = 10*10 = 100 -> padded up to a single 128-wide lane tile
    # (padded stats masked out of the cLN scan).
    H2, W2 = 10, 10
    x2 = jax.random.normal(jax.random.PRNGKey(3), (B, in_feat, H2, W2), jnp.float32)
    out2 = jax.block_until_ready(posterior_converter(x2, params))
    ref2 = jax.block_until_ready(reference(x2, params))
    assert out2.shape == (B, out_feat, H2, W2)
    assert jnp.allclose(out2, ref2, atol=2e-3, rtol=2e-3), "mismatch vs reference (padded)"

    # case 3: T = 24*32 = 768 with tile_t=512 -> multi-vreg roll shifts
    # (up to 256 lanes), cross-tile carry AND end-of-time padding in tile 2.
    H3, W3 = 24, 32
    x3 = jax.random.normal(jax.random.PRNGKey(7), (B, in_feat, H3, W3), jnp.float32)
    out3 = jax.block_until_ready(posterior_converter(x3, params, tile_t=512))
    ref3 = jax.block_until_ready(reference(x3, params))
    assert out3.shape == (B, out_feat, H3, W3)
    assert jnp.allclose(out3, ref3, atol=2e-3, rtol=2e-3), "mismatch vs reference (scan)"

    print("KERNEL_OK")
</pallas_src>

<mosaic_0001>
module attributes {stable_mosaic.version = 11 : i64} {
  func.func @posterior_converter_kernel(%arg0: i32, %arg1: i32, %arg2: memref<1x6x128xf32, #tpu.memory_space<vmem>>, %arg3: memref<8x6xf32, #tpu.memory_space<vmem>>, %arg4: memref<8x1xf32, #tpu.memory_space<vmem>>, %arg5: memref<8x1xf32, #tpu.memory_space<vmem>>, %arg6: memref<8x1xf32, #tpu.memory_space<vmem>>, %arg7: memref<8x8xf32, #tpu.memory_space<vmem>>, %arg8: memref<8x1xf32, #tpu.memory_space<vmem>>, %arg9: memref<1x8x128xf32, #tpu.memory_space<vmem>>, %arg10: memref<2x1xf32, #tpu.memory_space<vmem>>) attributes {dimension_semantics = [#tpu.dimension_semantics<parallel>, #tpu.dimension_semantics<arbitrary>], iteration_bounds = array<i64: 2, 2>, scalar_prefetch = 0 : i64, scratch_operands = 1 : i64, tpu.core_type = #tpu.core_type<tc>, window_params = [{transform_indices = @transform_0, window_bounds = array<i64: 1, 6, 128>}, {pipeline_mode = #tpu.pipeline_mode<synchronous>, transform_indices = @transform_1, window_bounds = array<i64: 8, 6>}, {pipeline_mode = #tpu.pipeline_mode<synchronous>, transform_indices = @transform_2, window_bounds = array<i64: 8, 1>}, {pipeline_mode = #tpu.pipeline_mode<synchronous>, transform_indices = @transform_3, window_bounds = array<i64: 8, 1>}, {pipeline_mode = #tpu.pipeline_mode<synchronous>, transform_indices = @transform_4, window_bounds = array<i64: 8, 1>}, {pipeline_mode = #tpu.pipeline_mode<synchronous>, transform_indices = @transform_5, window_bounds = array<i64: 8, 8>}, {pipeline_mode = #tpu.pipeline_mode<synchronous>, transform_indices = @transform_6, window_bounds = array<i64: 8, 1>}, {transform_indices = @transform_7, window_bounds = array<i64: 1, 8, 128>}]} {
    %c0_i32 = arith.constant 0 : i32
    %0 = arith.cmpi eq, %arg1, %c0_i32 : i32
    %1 = arith.extui %0 : i1 to i32
    %c0_i32_0 = arith.constant 0 : i32
    %2 = arith.cmpi ne, %1, %c0_i32_0 : i32
    scf.if %2 {
      %cst_41 = arith.constant 0.000000e+00 : f32
      %142 = vector.broadcast %cst_41 : f32 to vector<2x1xf32>
      %c0_42 = arith.constant 0 : index
      %c0_43 = arith.constant 0 : index
      %143 = vector.load %arg10[%c0_42, %c0_43] : memref<2x1xf32, #tpu.memory_space<vmem>>, vector<2x1xf32>
      tpu.vector_store %arg10[%c0_42, %c0_43], %142 {strides = array<i32>} : memref<2x1xf32, #tpu.memory_space<vmem>>, vector<2x1xf32>,
    } else {
    }
    %c0 = arith.constant 0 : index
    %c0_1 = arith.constant 0 : index
    %c0_2 = arith.constant 0 : index
    %3 = vector.load %arg2[%c0, %c0_1, %c0_2] : memref<1x6x128xf32, #tpu.memory_space<vmem>>, vector<1x6x128xf32>
    %4 = vector.shape_cast %3 : vector<1x6x128xf32> to vector<6x128xf32>
    %c0_3 = arith.constant 0 : index
    %c0_4 = arith.constant 0 : index
    %5 = vector.load %arg3[%c0_3, %c0_4] : memref<8x6xf32, #tpu.memory_space<vmem>>, vector<8x6xf32>
    %cst = arith.constant dense<0.000000e+00> : vector<8x128xf32>
    %6 = tpu.matmul %5, %4, %cst {dimension_numbers = #tpu.dot_dimension_numbers<[1], [0], [0], [1], [0, 0, 1, 1], [], []>} : vector<8x6xf32>, vector<6x128xf32>, vector<8x128xf32> -> vector<8x128xf32>
    %c0_5 = arith.constant 0 : index
    %c0_6 = arith.constant 0 : index
    %7 = vector.load %arg4[%c0_5, %c0_6] : memref<8x1xf32, #tpu.memory_space<vmem>>, vector<8x1xf32>
    %8 = vector.broadcast %7 : vector<8x1xf32> to vector<8x128xf32>
    %9 = arith.addf %6, %8 : vector<8x128xf32>
    %cst_7 = arith.constant dense<0.000000e+00> : vector<128xf32>
    %10 = vector.multi_reduction <add>, %9, %cst_7 [0] : vector<8x128xf32> to vector<128xf32>
    %11 = vector.shape_cast %10 : vector<128xf32> to vector<1x128xf32>
    %12 = arith.mulf %9, %9 : vector<8x128xf32>
    %cst_8 = arith.constant dense<0.000000e+00> : vector<128xf32>
    %13 = vector.multi_reduction <add>, %12, %cst_8 [0] : vector<8x128xf32> to vector<128xf32>
    %14 = vector.shape_cast %13 : vector<128xf32> to vector<1x128xf32>
    %15 = tpu.iota {dimensions = array<i32: 0>} : vector<2x128xi32>
    %c0_i32_9 = arith.constant 0 : i32
    %16 = vector.broadcast %c0_i32_9 : i32 to vector<2x128xi32>
    %17 = arith.cmpi eq, %15, %16 : vector<2x128xi32>
    %18 = vector.shape_cast %11 : vector<1x128xf32> to vector<1x128xf32>
    %19 = vector.broadcast %18 : vector<1x128xf32> to vector<2x128xf32>
    %20 = vector.shape_cast %14 : vector<1x128xf32> to vector<1x128xf32>
    %21 = vector.broadcast %20 : vector<1x128xf32> to vector<2x128xf32>
    %22 = arith.select %17, %19, %21 : vector<2x128xi1>, vector<2x128xf32>
    %23 = tpu.iota {dimensions = array<i32: 1>} : vector<1x128xi32>
    %c128_i32 = arith.constant 128 : i32
    %24 = arith.muli %arg1, %c128_i32 : i32
    %25 = vector.broadcast %24 : i32 to vector<1x128xi32>
    %26 = arith.addi %23, %25 : vector<1x128xi32>
    %c256_i32 = arith.constant 256 : i32
    %27 = vector.broadcast %c256_i32 : i32 to vector<1x128xi32>
    %28 = arith.cmpi slt, %26, %27 : vector<1x128xi32>
    %29 = arith.extui %28 : vector<1x128xi1> to vector<1x128xi32>
    %30 = arith.sitofp %29 : vector<1x128xi32> to vector<1x128xf32>
    %31 = vector.broadcast %30 : vector<1x128xf32> to vector<2x128xf32>
    %32 = arith.mulf %22, %31 : vector<2x128xf32>
    %c1_i32 = arith.constant 1 : i32
    %33 = tpu.dynamic_rotate %32 by %c1_i32 dim 1 : vector<2x128xf32>, i32 -> vector<2x128xf32>
    %c1_i32_10 = arith.constant 1 : i32
    %34 = vector.broadcast %c1_i32_10 : i32 to vector<1x128xi32>
    %35 = arith.cmpi sge, %23, %34 : vector<1x128xi32>
    %36 = arith.extui %35 : vector<1x128xi1> to vector<1x128xi32>
    %37 = arith.sitofp %36 : vector<1x128xi32> to vector<1x128xf32>
    %38 = vector.broadcast %37 : vector<1x128xf32> to vector<2x128xf32>
    %39 = arith.mulf %33, %38 : vector<2x128xf32>
    %40 = arith.addf %32, %39 : vector<2x128xf32>
    %c2_i32 = arith.constant 2 : i32
    %41 = tpu.dynamic_rotate %40 by %c2_i32 dim 1 : vector<2x128xf32>, i32 -> vector<2x128xf32>
    %c2_i32_11 = arith.constant 2 : i32
    %42 = vector.broadcast %c2_i32_11 : i32 to vector<1x128xi32>
    %43 = arith.cmpi sge, %23, %42 : vector<1x128xi32>
    %44 = arith.extui %43 : vector<1x128xi1> to vector<1x128xi32>
    %45 = arith.sitofp %44 : vector<1x128xi32> to vector<1x128xf32>
    %46 = vector.broadcast %45 : vector<1x128xf32> to vector<2x128xf32>
    %47 = arith.mulf %41, %46 : vector<2x128xf32>
    %48 = arith.addf %40, %47 : vector<2x128xf32>
    %c4_i32 = arith.constant 4 : i32
    %49 = tpu.dynamic_rotate %48 by %c4_i32 dim 1 : vector<2x128xf32>, i32 -> vector<2x128xf32>
    %c4_i32_12 = arith.constant 4 : i32
    %50 = vector.broadcast %c4_i32_12 : i32 to vector<1x128xi32>
    %51 = arith.cmpi sge, %23, %50 : vector<1x128xi32>
    %52 = arith.extui %51 : vector<1x128xi1> to vector<1x128xi32>
    %53 = arith.sitofp %52 : vector<1x128xi32> to vector<1x128xf32>
    %54 = vector.broadcast %53 : vector<1x128xf32> to vector<2x128xf32>
    %55 = arith.mulf %49, %54 : vector<2x128xf32>
    %56 = arith.addf %48, %55 : vector<2x128xf32>
    %c8_i32 = arith.constant 8 : i32
    %57 = tpu.dynamic_rotate %56 by %c8_i32 dim 1 : vector<2x128xf32>, i32 -> vector<2x128xf32>
    %c8_i32_13 = arith.constant 8 : i32
    %58 = vector.broadcast %c8_i32_13 : i32 to vector<1x128xi32>
    %59 = arith.cmpi sge, %23, %58 : vector<1x128xi32>
    %60 = arith.extui %59 : vector<1x128xi1> to vector<1x128xi32>
    %61 = arith.sitofp %60 : vector<1x128xi32> to vector<1x128xf32>
    %62 = vector.broadcast %61 : vector<1x128xf32> to vector<2x128xf32>
    %63 = arith.mulf %57, %62 : vector<2x128xf32>
    %64 = arith.addf %56, %63 : vector<2x128xf32>
    %c16_i32 = arith.constant 16 : i32
    %65 = tpu.dynamic_rotate %64 by %c16_i32 dim 1 : vector<2x128xf32>, i32 -> vector<2x128xf32>
    %c16_i32_14 = arith.constant 16 : i32
    %66 = vector.broadcast %c16_i32_14 : i32 to vector<1x128xi32>
    %67 = arith.cmpi sge, %23, %66 : vector<1x128xi32>
    %68 = arith.extui %67 : vector<1x128xi1> to vector<1x128xi32>
    %69 = arith.sitofp %68 : vector<1x128xi32> to vector<1x128xf32>
    %70 = vector.broadcast %69 : vector<1x128xf32> to vector<2x128xf32>
    %71 = arith.mulf %65, %70 : vector<2x128xf32>
    %72 = arith.addf %64, %71 : vector<2x128xf32>
    %c32_i32 = arith.constant 32 : i32
    %73 = tpu.dynamic_rotate %72 by %c32_i32 dim 1 : vector<2x128xf32>, i32 -> vector<2x128xf32>
    %c32_i32_15 = arith.constant 32 : i32
    %74 = vector.broadcast %c32_i32_15 : i32 to vector<1x128xi32>
    %75 = arith.cmpi sge, %23, %74 : vector<1x128xi32>
    %76 = arith.extui %75 : vector<1x128xi1> to vector<1x128xi32>
    %77 = arith.sitofp %76 : vector<1x128xi32> to vector<1x128xf32>
    %78 = vector.broadcast %77 : vector<1x128xf32> to vector<2x128xf32>
    %79 = arith.mulf %73, %78 : vector<2x128xf32>
    %80 = arith.addf %72, %79 : vector<2x128xf32>
    %c64_i32 = arith.constant 64 : i32
    %81 = tpu.dynamic_rotate %80 by %c64_i32 dim 1 : vector<2x128xf32>, i32 -> vector<2x128xf32>
    %c64_i32_16 = arith.constant 64 : i32
    %82 = vector.broadcast %c64_i32_16 : i32 to vector<1x128xi32>
    %83 = arith.cmpi sge, %23, %82 : vector<1x128xi32>
    %84 = arith.extui %83 : vector<1x128xi1> to vector<1x128xi32>
    %85 = arith.sitofp %84 : vector<1x128xi32> to vector<1x128xf32>
    %86 = vector.broadcast %85 : vector<1x128xf32> to vector<2x128xf32>
    %87 = arith.mulf %81, %86 : vector<2x128xf32>
    %88 = arith.addf %80, %87 : vector<2x128xf32>
    %c0_17 = arith.constant 0 : index
    %c0_18 = arith.constant 0 : index
    %89 = vector.load %arg10[%c0_17, %c0_18] : memref<2x1xf32, #tpu.memory_space<vmem>>, vector<2x1xf32>
    %90 = vector.broadcast %89 : vector<2x1xf32> to vector<2x128xf32>
    %91 = arith.addf %88, %90 : vector<2x128xf32>
    %92 = vector.extract_strided_slice %91 {offsets = [0, 127], sizes = [2, 1], strides = [1, 1]} : vector<2x128xf32> to vector<2x1xf32>
    %c0_19 = arith.constant 0 : index
    %c0_20 = arith.constant 0 : index
    %93 = vector.load %arg10[%c0_19, %c0_20] : memref<2x1xf32, #tpu.memory_space<vmem>>, vector<2x1xf32>
    tpu.vector_store %arg10[%c0_19, %c0_20], %92 {strides = array<i32>} : memref<2x1xf32, #tpu.memory_space<vmem>>, vector<2x1xf32>,
    %94 = vector.extract_strided_slice %91 {offsets = [0, 0], sizes = [1, 128], strides = [1, 1]} : vector<2x128xf32> to vector<1x128xf32>
    %95 = vector.extract_strided_slice %91 {offsets = [1, 0], sizes = [1, 128], strides = [1, 1]} : vector<2x128xf32> to vector<1x128xf32>
    %c1_i32_21 = arith.constant 1 : i32
    %96 = vector.broadcast %c1_i32_21 : i32 to vector<1x128xi32>
    %97 = arith.addi %26, %96 : vector<1x128xi32>
    %98 = arith.sitofp %97 : vector<1x128xi32> to vector<1x128xf32>
    %cst_22 = arith.constant 8.000000e+00 : f32
    %99 = vector.broadcast %cst_22 : f32 to vector<1x128xf32>
    %100 = arith.mulf %98, %99 : vector<1x128xf32>
    %cst_23 = arith.constant 1.000000e+00 : f32
    %101 = vector.broadcast %cst_23 : f32 to vector<1x128xf32>
    %102 = arith.divf %101, %100 : vector<1x128xf32>
    %103 = arith.mulf %94, %102 : vector<1x128xf32>
    %104 = arith.mulf %95, %102 : vector<1x128xf32>
    %105 = arith.mulf %103, %103 : vector<1x128xf32>
    %106 = arith.subf %104, %105 : vector<1x128xf32>
    %cst_24 = arith.constant 0.000000e+00 : f32
    %107 = vector.broadcast %cst_24 : f32 to vector<1x128xf32>
    %108 = arith.maximumf %106, %107 : vector<1x128xf32>
    %109 = math.sqrt %108 : vector<1x128xf32>
    %cst_25 = arith.constant 9.99999996E-13 : f32
    %110 = vector.broadcast %cst_25 : f32 to vector<1x128xf32>
    %111 = arith.addf %109, %110 : vector<1x128xf32>
    %cst_26 = arith.constant 1.000000e+00 : f32
    %112 = vector.broadcast %cst_26 : f32 to vector<1x128xf32>
    %113 = arith.divf %112, %111 : vector<1x128xf32>
    %114 = vector.broadcast %103 : vector<1x128xf32> to vector<8x128xf32>
    %115 = arith.subf %9, %114 : vector<8x128xf32>
    %116 = vector.broadcast %113 : vector<1x128xf32> to vector<8x128xf32>
    %117 = arith.mulf %115, %116 : vector<8x128xf32>
    %c0_27 = arith.constant 0 : index
    %c0_28 = arith.constant 0 : index
    %118 = vector.load %arg5[%c0_27, %c0_28] : memref<8x1xf32, #tpu.memory_space<vmem>>, vector<8x1xf32>
    %119 = vector.broadcast %118 : vector<8x1xf32> to vector<8x128xf32>
    %120 = arith.mulf %117, %119 : vector<8x128xf32>
    %c0_29 = arith.constant 0 : index
    %c0_30 = arith.constant 0 : index
    %121 = vector.load %arg6[%c0_29, %c0_30] : memref<8x1xf32, #tpu.memory_space<vmem>>, vector<8x1xf32>
    %122 = vector.broadcast %121 : vector<8x1xf32> to vector<8x128xf32>
    %123 = arith.addf %120, %122 : vector<8x128xf32>
    %c0_31 = arith.constant 0 : index
    %c0_32 = arith.constant 0 : index
    %124 = vector.load %arg7[%c0_31, %c0_32] : memref<8x8xf32, #tpu.memory_space<vmem>>, vector<8x8xf32>
    %cst_33 = arith.constant dense<0.000000e+00> : vector<8x128xf32>
    %125 = tpu.matmul %124, %123, %cst_33 {dimension_numbers = #tpu.dot_dimension_numbers<[1], [0], [0], [1], [0, 0, 1, 1], [], []>} : vector<8x8xf32>, vector<8x128xf32>, vector<8x128xf32> -> vector<8x128xf32>
    %c0_34 = arith.constant 0 : index
    %c0_35 = arith.constant 0 : index
    %126 = vector.load %arg8[%c0_34, %c0_35] : memref<8x1xf32, #tpu.memory_space<vmem>>, vector<8x1xf32>
    %127 = vector.broadcast %126 : vector<8x1xf32> to vector<8x128xf32>
    %128 = arith.addf %125, %127 : vector<8x128xf32>
    %cst_36 = arith.constant dense<0xFF800000> : vector<128xf32>
    %129 = vector.multi_reduction <maximumf>, %128, %cst_36 [0] : vector<8x128xf32> to vector<128xf32>
    %130 = vector.shape_cast %129 : vector<128xf32> to vector<1x128xf32>
    %131 = vector.broadcast %130 : vector<1x128xf32> to vector<8x128xf32>
    %132 = arith.subf %128, %131 : vector<8x128xf32>
    %133 = math.exp %132 : vector<8x128xf32>
    %cst_37 = arith.constant dense<0.000000e+00> : vector<128xf32>
    %134 = vector.multi_reduction <add>, %133, %cst_37 [0] : vector<8x128xf32> to vector<128xf32>
    %135 = vector.shape_cast %134 : vector<128xf32> to vector<1x128xf32>
    %136 = tpu.reciprocal %135 {approx = true} : vector<1x128xf32> -> vector<1x128xf32>
    %137 = vector.broadcast %136 : vector<1x128xf32> to vector<8x128xf32>
    %138 = arith.mulf %133, %137 : vector<8x128xf32>
    %c0_38 = arith.constant 0 : index
    %c0_39 = arith.constant 0 : index
    %c0_40 = arith.constant 0 : index
    %139 = vector.load %arg9[%c0_38, %c0_39, %c0_40] : memref<1x8x128xf32, #tpu.memory_space<vmem>>, vector<1x8x128xf32>
    %140 = vector.shape_cast %139 : vector<1x8x128xf32> to vector<8x128xf32>
    %141 = vector.shape_cast %138 : vector<8x128xf32> to vector<1x8x128xf32>
    tpu.vector_store %arg9[%c0_38, %c0_39, %c0_40], %141 {strides = array<i32>} : memref<1x8x128xf32, #tpu.memory_space<vmem>>, vector<1x8x128xf32>,
    return
  }
  func.func @transform_0(%arg0: i32, %arg1: i32) -> (i32, i32, i32) {
    %c0_i32 = arith.constant 0 : i32
    %c0_i32_0 = arith.constant 0 : i32
    return %arg0, %c0_i32, %arg1 : i32, i32, i32
  }
  func.func @transform_1(%arg0: i32, %arg1: i32) -> (i32, i32) {
    %c0_i32 = arith.constant 0 : i32
    %c0_i32_0 = arith.constant 0 : i32
    %c0_i32_1 = arith.constant 0 : i32
    return %c0_i32, %c0_i32_0 : i32, i32
  }
  func.func @transform_2(%arg0: i32, %arg1: i32) -> (i32, i32) {
    %c0_i32 = arith.constant 0 : i32
    %c0_i32_0 = arith.constant 0 : i32
    %c0_i32_1 = arith.constant 0 : i32
    return %c0_i32, %c0_i32_0 : i32, i32
  }
  func.func @transform_3(%arg0: i32, %arg1: i32) -> (i32, i32) {
    %c0_i32 = arith.constant 0 : i32
    %c0_i32_0 = arith.constant 0 : i32
    %c0_i32_1 = arith.constant 0 : i32
    return %c0_i32, %c0_i32_0 : i32, i32
  }
  func.func @transform_4(%arg0: i32, %arg1: i32) -> (i32, i32) {
    %c0_i32 = arith.constant 0 : i32
    %c0_i32_0 = arith.constant 0 : i32
    %c0_i32_1 = arith.constant 0 : i32
    return %c0_i32, %c0_i32_0 : i32, i32
  }
  func.func @transform_5(%arg0: i32, %arg1: i32) -> (i32, i32) {
    %c0_i32 = arith.constant 0 : i32
    %c0_i32_0 = arith.constant 0 : i32
    %c0_i32_1 = arith.constant 0 : i32
    return %c0_i32, %c0_i32_0 : i32, i32
  }
  func.func @transform_6(%arg0: i32, %arg1: i32) -> (i32, i32) {
    %c0_i32 = arith.constant 0 : i32
    %c0_i32_0 = arith.constant 0 : i32
    %c0_i32_1 = arith.constant 0 : i32
    return %c0_i32, %c0_i32_0 : i32, i32
  }
  func.func @transform_7(%arg0: i32, %arg1: i32) -> (i32, i32, i32) {
    %c0_i32 = arith.constant 0 : i32
    %c0_i32_0 = arith.constant 0 : i32
    return %arg0, %c0_i32, %arg1 : i32, i32, i32
  }
}

</mosaic_0001>

<llo_original>
// kernel: tpu_custom_call.1
$region0: #{tpu_custom_call.1}
  #allocation0 [shape = 'u32[]', space=smem, size = 0x4, offset = 0x4, fixed_abs, tag = 'smem constant byte address 0x4 - core index']
  #allocation1 [shape = 'u32[144,128]{1,0:T(1,128)}', space=vmem, size = 0x12000, scoped, tag = 'internal scratch']
  #allocation2 [shape = 'f32[2,1]{1,0:T(2,128)}', space=vmem, size = 0x400, scoped, tag = 'scratch operand']
  %s0 = inlined_call_operand.vmem [shape: f32[2,6,256], index: 0, kind: input, shape index: {}]
  %s1 = inlined_call_operand.vmem [shape: f32[8,6], index: 1, kind: input, shape index: {}]
  %s2 = inlined_call_operand.vmem [shape: f32[8,1], index: 2, kind: input, shape index: {}]
  %s3 = inlined_call_operand.vmem [shape: f32[8,1], index: 3, kind: input, shape index: {}]
  %s4 = inlined_call_operand.vmem [shape: f32[8,1], index: 4, kind: input, shape index: {}]
  %s5 = inlined_call_operand.vmem [shape: f32[8,8], index: 5, kind: input, shape index: {}]
  %s6 = inlined_call_operand.vmem [shape: f32[8,1], index: 6, kind: input, shape index: {}]
  %s7 = inlined_call_operand.hbm [shape: f32[2,8,256], index: 7, kind: output, shape index: {}]
  %s8 = sld [smem:[#allocation0]]
  $region65: #{tpu_custom_call.1} parent=0
    _
  %s10 = ssub.s32 1, %s8
  %s11 = scalar_select 0, %s10, %s8
  $region1: #{tpu_custom_call.1} parent=0
    #allocation3 [shape = 'u8[8192]{0}', space=vmem, size = 0x2000, scoped, tag = 'output window, operand 0']
    #allocation4 [shape = 's32[2]{0}', space=sflag, size = 0x8, scoped, tag = 'scoped memory for tpu_custom_call.1']
    %12 = vsyncpa [#allocation4], 0
    %s13 = scalar_lea.sflag [#allocation4], 1
    %14 = vsyncpa %s13, 0
    loop: start=0, step=1, limit=6
    $region2: #{tpu_custom_call.1} parent=1 // loop_pre_header
      _
    $region3: #{tpu_custom_call.1} parent=1 // loop_header
      %s16 = sphi 0, %s20
      %p17 = scmp.ge.s32.totalorder %s16, 6
      %s23 = sphi 0, %s35
      %s24 = sphi 0, %s31
      %s25 = sphi 0, %s23
      %s26 = sphi 0, %s24
      %s27 = sphi 0, %s25
      %s28 = sphi 0, %s26
      %s40 = sphi 0, %s42
      %s43 = sphi 0, %s40
      %s44 = sphi 0, %s43
      %s60 = sphi 0, %s44
      %s64 = sphi 0, %s64
      %s66 = sphi 0, %s64
      %s67 = sphi 0, %s66
      %s81 = sphi 0, %s67
      %s85 = sphi 0, %s85
      %s87 = sphi 0, %s85
      %s88 = sphi 0, %s87
      %s102 = sphi 0, %s88
      %s106 = sphi 0, %s106
      %s108 = sphi 0, %s106
      %s109 = sphi 0, %s108
      %s123 = sphi 0, %s109
      %s127 = sphi 0, %s127
      %s129 = sphi 0, %s127
      %s130 = sphi 0, %s129
      %s144 = sphi 0, %s130
      %s148 = sphi 0, %s148
      %s150 = sphi 0, %s148
      %s151 = sphi 0, %s150
      %s165 = sphi 0, %s151
      %s169 = sphi 0, %s169
      %s171 = sphi 0, %s169
      %s172 = sphi 0, %s171
      %s186 = sphi 0, %s172
      %s194 = sphi 0, %s196
      %s197 = sphi 0, %s194
      %s198 = sphi 0, %s197
      %s214 = sphi 0, %s198
    $region4: #{tpu_custom_call.1} parent=1 // loop_header_branch
      %19 = sbr.rel (%p17) target = $region8
    $region5: #{tpu_custom_call.1} parent=1 // loop_body
      %s21 = ssub.s32 %s16, 1
      %s22 = ssub.s32 %s16, 2
      %s29 = sadd.s32 1, %s24
      %p30 = scmp.ge.s32.totalorder %s29, 2
      %s31 = scalar_select %p30, 0, %s29
      %s32 = sadd.s32 1, %s23
      %s33 = scalar_select %p30, %s32, %s23
      %p34 = scmp.ge.s32.totalorder %s33, 2
      %s35 = scalar_select %p34, 0, %s33
      %s36 = ssub.s32 %s23, %s35
      %s37 = ssub.s32 %s24, %s31
      %s38 = sor.u32 %s36, %s37
      %p39 = scmp.eq.s32.totalorder %s38, 0
      %s41 = sadd.s32 %s40, 1
      %s42 = scalar_select %p39, %s40, %s41
      %p45 = pneg %p39
      %p46 = scmp.eq.s32.totalorder %s16, 3
      %p47 = por %p45, %p46
      %p48 = scmp.ne.s32.totalorder %s40, %s43
      %p49 = scmp.eq.s32.totalorder %s16, 0
      %p50 = por %p48, %p49
      %p51 = scmp.ne.s32.totalorder %s40, %s43
      %p52 = scmp.eq.s32.totalorder %s21, 3
      %p53 = por %p51, %p52
      %p54 = scmp.ne.s32.totalorder %s43, %s44
      %p55 = scmp.eq.s32.totalorder %s21, 0
      %p56 = por %p54, %p55
      %p57 = scmp.ne.s32.totalorder %s43, %s44
      %p58 = scmp.eq.s32.totalorder %s22, 3
      %p59 = por %p57, %p58
      %p61 = scmp.ne.s32.totalorder %s44, %s60
      %p62 = scmp.eq.s32.totalorder %s22, 0
      %p63 = por %p61, %p62
      %s65 = sadd.s32 %s64, 1
      %p68 = scmp.eq.s32.totalorder %s16, 3
      %p69 = scmp.ne.s32.totalorder %s64, %s66
      %p70 = scmp.eq.s32.totalorder %s16, 0
      %p71 = por %p69, %p70
      %p72 = scmp.ne.s32.totalorder %s64, %s66
      %p73 = scmp.eq.s32.totalorder %s21, 3
      %p74 = por %p72, %p73
      %p75 = scmp.ne.s32.totalorder %s66, %s67
      %p76 = scmp.eq.s32.totalorder %s21, 0
      %p77 = por %p75, %p76
      %p78 = scmp.ne.s32.totalorder %s66, %s67
      %p79 = scmp.eq.s32.totalorder %s22, 3
      %p80 = por %p78, %p79
      %p82 = scmp.ne.s32.totalorder %s67, %s81
      %p83 = scmp.eq.s32.totalorder %s22, 0
      %p84 = por %p82, %p83
      %s86 = sadd.s32 %s85, 1
      %p89 = scmp.eq.s32.totalorder %s16, 3
      %p90 = scmp.ne.s32.totalorder %s85, %s87
      %p91 = scmp.eq.s32.totalorder %s16, 0
      %p92 = por %p90, %p91
      %p93 = scmp.ne.s32.totalorder %s85, %s87
      %p94 = scmp.eq.s32.totalorder %s21, 3
      %p95 = por %p93, %p94
      %p96 = scmp.ne.s32.totalorder %s87, %s88
      %p97 = scmp.eq.s32.totalorder %s21, 0
      %p98 = por %p96, %p97
      %p99 = scmp.ne.s32.totalorder %s87, %s88
      %p100 = scmp.eq.s32.totalorder %s22, 3
      %p101 = por %p99, %p100
      %p103 = scmp.ne.s32.totalorder %s88, %s102
      %p104 = scmp.eq.s32.totalorder %s22, 0
      %p105 = por %p103, %p104
      %s107 = sadd.s32 %s106, 1
      %p110 = scmp.eq.s32.totalorder %s16, 3
      %p111 = scmp.ne.s32.totalorder %s106, %s108
      %p112 = scmp.eq.s32.totalorder %s16, 0
      %p113 = por %p111, %p112
      %p114 = scmp.ne.s32.totalorder %s106, %s108
      %p115 = scmp.eq.s32.totalorder %s21, 3
      %p116 = por %p114, %p115
      %p117 = scmp.ne.s32.totalorder %s108, %s109
      %p118 = scmp.eq.s32.totalorder %s21, 0
      %p119 = por %p117, %p118
      %p120 = scmp.ne.s32.totalorder %s108, %s109
      %p121 = scmp.eq.s32.totalorder %s22, 3
      %p122 = por %p120, %p121
      %p124 = scmp.ne.s32.totalorder %s109, %s123
      %p125 = scmp.eq.s32.totalorder %s22, 0
      %p126 = por %p124, %p125
      %s128 = sadd.s32 %s127, 1
      %p131 = scmp.eq.s32.totalorder %s16, 3
      %p132 = scmp.ne.s32.totalorder %s127, %s129
      %p133 = scmp.eq.s32.totalorder %s16, 0
      %p134 = por %p132, %p133
      %p135 = scmp.ne.s32.totalorder %s127, %s129
      %p136 = scmp.eq.s32.totalorder %s21, 3
      %p137 = por %p135, %p136
      %p138 = scmp.ne.s32.totalorder %s129, %s130
      %p139 = scmp.eq.s32.totalorder %s21, 0
      %p140 = por %p138, %p139
      %p141 = scmp.ne.s32.totalorder %s129, %s130
      %p142 = scmp.eq.s32.totalorder %s22, 3
      %p143 = por %p141, %p142
      %p145 = scmp.ne.s32.totalorder %s130, %s144
      %p146 = scmp.eq.s32.totalorder %s22, 0
      %p147 = por %p145, %p146
      %s149 = sadd.s32 %s148, 1
      %p152 = scmp.eq.s32.totalorder %s16, 3
      %p153 = scmp.ne.s32.totalorder %s148, %s150
      %p154 = scmp.eq.s32.totalorder %s16, 0
      %p155 = por %p153, %p154
      %p156 = scmp.ne.s32.totalorder %s148, %s150
      %p157 = scmp.eq.s32.totalorder %s21, 3
      %p158 = por %p156, %p157
      %p159 = scmp.ne.s32.totalorder %s150, %s151
      %p160 = scmp.eq.s32.totalorder %s21, 0
      %p161 = por %p159, %p160
      %p162 = scmp.ne.s32.totalorder %s150, %s151
      %p163 = scmp.eq.s32.totalorder %s22, 3
      %p164 = por %p162, %p163
      %p166 = scmp.ne.s32.totalorder %s151, %s165
      %p167 = scmp.eq.s32.totalorder %s22, 0
      %p168 = por %p166, %p167
      %s170 = sadd.s32 %s169, 1
      %p173 = scmp.eq.s32.totalorder %s16, 3
      %p174 = scmp.ne.s32.totalorder %s169, %s171
      %p175 = scmp.eq.s32.totalorder %s16, 0
      %p176 = por %p174, %p175
      %p177 = scmp.ne.s32.totalorder %s169, %s171
      %p178 = scmp.eq.s32.totalorder %s21, 3
      %p179 = por %p177, %p178
      %p180 = scmp.ne.s32.totalorder %s171, %s172
      %p181 = scmp.eq.s32.totalorder %s21, 0
      %p182 = por %p180, %p181
      %p183 = scmp.ne.s32.totalorder %s171, %s172
      %p184 = scmp.eq.s32.totalorder %s22, 3
      %p185 = por %p183, %p184
      %p187 = scmp.ne.s32.totalorder %s172, %s186
      %p188 = scmp.eq.s32.totalorder %s22, 0
      %p189 = por %p187, %p188
      %s190 = ssub.s32 %s23, %s35
      %s191 = ssub.s32 %s24, %s31
      %s192 = sor.u32 %s190, %s191
      %p193 = scmp.eq.s32.totalorder %s192, 0
      %s195 = sadd.s32 %s194, 1
      %s196 = scalar_select %p193, %s194, %s195
      %p199 = pneg %p193
      %p200 = scmp.eq.s32.totalorder %s16, 3
      %p201 = por %p199, %p200
      %p202 = scmp.ne.s32.totalorder %s194, %s197
      %p203 = scmp.eq.s32.totalorder %s16, 0
      %p204 = por %p202, %p203
      %p205 = scmp.ne.s32.totalorder %s194, %s197
      %p206 = scmp.eq.s32.totalorder %s21, 3
      %p207 = por %p205, %p206
      %p208 = scmp.ne.s32.totalorder %s197, %s198
      %p209 = scmp.eq.s32.totalorder %s21, 0
      %p210 = por %p208, %p209
      %p211 = scmp.ne.s32.totalorder %s197, %s198
      %p212 = scmp.eq.s32.totalorder %s22, 3
      %p213 = por %p211, %p212
      %p215 = scmp.ne.s32.totalorder %s198, %s214
      %p216 = scmp.eq.s32.totalorder %s22, 0
      %p217 = por %p215, %p216
      %p218 = scmp.le.s32.totalorder 1, %s16
      %p219 = scmp.lt.s32.totalorder %s16, 5
      %p220 = pnand %p218, %p219
      %p221 = pneg %p220
      // Predicated region
      $region9: #{tpu_custom_call.1} parent=5 // pred_check
        _
      $region10: #{tpu_custom_call.1} parent=5 // pred_check_branch
        %223 = sbr.rel (%p220) target = $region12
      $region11: #{tpu_custom_call.1} parent=5 // pred_region
        %s224 = ssub.s32 %s16, 1
        // Predicated region
        $region13: #{tpu_custom_call.1} parent=11 // pred_check
          %p225 = pneg %p77
        $region14: #{tpu_custom_call.1} parent=11 // pred_check_branch
          %227 = sbr.rel (%p225) target = $region16
        $region15: #{tpu_custom_call.1} parent=11 // pred_region
          _
        $region16: #{tpu_custom_call.1} parent=11 // pred_fallthru
          _
        // Predicated region
        $region17: #{tpu_custom_call.1} parent=11 // pred_check
          %p228 = pneg %p98
        $region18: #{tpu_custom_call.1} parent=11 // pred_check_branch
          %230 = sbr.rel (%p228) target = $region20
        $region19: #{tpu_custom_call.1} parent=11 // pred_region
          _
        $region20: #{tpu_custom_call.1} parent=11 // pred_fallthru
          _
        // Predicated region
        $region21: #{tpu_custom_call.1} parent=11 // pred_check
          %p231 = pneg %p119
        $region22: #{tpu_custom_call.1} parent=11 // pred_check_branch
          %233 = sbr.rel (%p231) target = $region24
        $region23: #{tpu_custom_call.1} parent=11 // pred_region
          _
        $region24: #{tpu_custom_call.1} parent=11 // pred_fallthru
          _
        // Predicated region
        $region25: #{tpu_custom_call.1} parent=11 // pred_check
          %p234 = pneg %p140
        $region26: #{tpu_custom_call.1} parent=11 // pred_check_branch
          %236 = sbr.rel (%p234) target = $region28
        $region27: #{tpu_custom_call.1} parent=11 // pred_region
          _
        $region28: #{tpu_custom_call.1} parent=11 // pred_fallthru
          _
        // Predicated region
        $region29: #{tpu_custom_call.1} parent=11 // pred_check
          %p237 = pneg %p161
        $region30: #{tpu_custom_call.1} parent=11 // pred_check_branch
          %239 = sbr.rel (%p237) target = $region32
        $region31: #{tpu_custom_call.1} parent=11 // pred_region
          _
        $region32: #{tpu_custom_call.1} parent=11 // pred_fallthru
          _
        // Predicated region
        $region33: #{tpu_custom_call.1} parent=11 // pred_check
          %p240 = pneg %p182
        $region34: #{tpu_custom_call.1} parent=11 // pred_check_branch
          %242 = sbr.rel (%p240) target = $region36
        $region35: #{tpu_custom_call.1} parent=11 // pred_region
          _
        $region36: #{tpu_custom_call.1} parent=11 // pred_fallthru
          _
      $region12: #{tpu_custom_call.1} parent=5 // pred_fallthru
        _
      %p243 = scmp.lt.s32.totalorder %s16, 4
      // Predicated region
      $region37: #{tpu_custom_call.1} parent=5 // pred_check
        %p244 = pneg %p243
      $region38: #{tpu_custom_call.1} parent=5 // pred_check_branch
        %246 = sbr.rel (%p244) target = $region40
      $region39: #{tpu_custom_call.1} parent=5 // pred_region
        // Predicated region
        $region41: #{tpu_custom_call.1} parent=39 // pred_check
          %p247 = pneg %p50
        $region42: #{tpu_custom_call.1} parent=39 // pred_check_branch
          %249 = sbr.rel (%p247) target = $region44
        $region43: #{tpu_custom_call.1} parent=39 // pred_region
          %p250 = scmp.lt.s32.totalorder %s23, 1
          %s251 = scalar_select %p250, %s23, 1
          %p252 = scmp.lt.s32.totalorder %s24, 1
          %s253 = scalar_select %p252, %s24, 1
          %s254 = smul.addr %s251, 2
          %s255 = sadd.s32 %s253, %s254
          %s256 = smul.addr %s255, 8
          %s257 = scalar_lea.vmem %s0, %s256
        $region44: #{tpu_custom_call.1} parent=39 // pred_fallthru
          _
      $region40: #{tpu_custom_call.1} parent=5 // pred_fallthru
        _
      %p258 = scmp.le.s32.totalorder 1, %s16
      %p259 = scmp.lt.s32.totalorder %s16, 5
      %p260 = pnand %p258, %p259
      %p261 = pneg %p260
      // Predicated region
      $region45: #{tpu_custom_call.1} parent=5 // pred_check
        _
      $region46: #{tpu_custom_call.1} parent=5 // pred_check_branch
        %263 = sbr.rel (%p260) target = $region48
      $region47: #{tpu_custom_call.1} parent=5 // pred_region
        %s264 = ssub.s32 %s16, 1
        %p265 = scmp.lt.s32.totalorder %s25, 1
        %s266 = scalar_select %p265, %s25, 1
        %p267 = scmp.lt.s32.totalorder %s26, 1
        %s268 = scalar_select %p267, %s26, 1
        %s269 = smul.addr %s266, 2
        %s270 = sadd.s32 %s268, %s269
        %s271 = smul.addr %s270, 8
        %s272 = scalar_lea.vmem %s0, %s271
        %p273 = pneg %p56
        %p274 = pneg %p53
        %p275 = pneg %p77
        %p276 = pneg %p74
        %p277 = pneg %p98
        %p278 = pneg %p95
        %p279 = pneg %p119
        %p280 = pneg %p116
        %p281 = pneg %p140
        %p282 = pneg %p137
        %p283 = pneg %p161
        %p284 = pneg %p158
        %p285 = pneg %p182
        %p286 = pneg %p179
        %p287 = pneg %p210
        %p288 = pneg %p207
        %s289 = sand.u32 %s197, 1
        %s290 = scalar_lea.sflag [#allocation4], %s289
        %s291 = sand.u32 %s197, 1
        %s292 = smul.addr %s291, 8
        %s293 = scalar_lea.vmem [#allocation3], %s292
        %p294 = scmp.lt.s32.totalorder %s25, 1
        %s295 = scalar_select %p294, %s25, 1
        %p296 = scmp.lt.s32.totalorder %s26, 1
        %s297 = scalar_select %p296, %s26, 1
        %s298 = smul.addr %s295, 2
        %s299 = sadd.s32 %s297, %s298
        %s300 = smul.addr %s299, 8
        %s301 = scalar_lea.vmem %s0, %s300
        %p302 = scmp.eq.s32.totalorder %s26, 0
        // Predicated region
        $region49: #{tpu_custom_call.1} parent=47 // pred_check
          %p303 = pneg %p302
        $region50: #{tpu_custom_call.1} parent=47 // pred_check_branch
          %305 = sbr.rel (%p303) target = $region52
        $region51: #{tpu_custom_call.1} parent=47 // pred_region
          %vm306 = vcmask 1024
          %307 = vst.msk [vmem:[#allocation2] sm:$0x3] %vm306, 0.0
        $region52: #{tpu_custom_call.1} parent=47 // pred_fallthru
          _
        %v308 = vld [vmem:[%s301] sm:$0x3f]
        %v309 = vld [vmem:[%s1] sm:$0xff]
        %v310 = vld [vmem:[%s2] sm:$0xff]
        %312 = vset.pattern.permute.xlu0 0
        %313 = vperm.xlu0 %312, %v310
        %v314 = vpop.permute.xlu0 %313
        %vm316 = vcmask 48128
        %v318 = vsel %vm316, %v309, 0
        %vm320 = vcmask 1045504
        %v322 = vsel %vm320, %v308, 0
        %324 = vmatprep.subr.mxu0 0.0
        %325 = vmatpush1.msra.mxu0 %v322
        %326 = vmatprep.subr.mxu0 0.0
        %327 = vmatpush1.msra.mxu0 0.0
        %328 = vmatprep.subr.mxu0 0.0
        %329 = vmatpush1.msra.mxu0 0.0
        %330 = vmatprep.subr.mxu0 0.0
        %331 = vmatpush1.msra.mxu0 0.0
        %332 = vmatprep.subr.mxu0 0.0
        %333 = vmatpush1.msra.mxu0 0.0
        %334 = vmatprep.subr.mxu0 0.0
        %335 = vmatpush1.msra.mxu0 0.0
        %336 = vmatprep.subr.mxu0 0.0
        %337 = vmatpush1.msra.mxu0 0.0
        %338 = vmatprep.subr.mxu0 0.0
        %339 = vmatpush1.msra.mxu0 0.0
        %340 = vmatprep.subr.mxu0 0.0
        %341 = vmatpush1.msra.mxu0 0.0
        %342 = vmatprep.subr.mxu0 0.0
        %343 = vmatpush1.msra.mxu0 0.0
        %344 = vmatprep.subr.mxu0 0.0
        %345 = vmatpush1.msra.mxu0 0.0
        %346 = vmatprep.subr.mxu0 0.0
        %347 = vmatpush1.msra.mxu0 0.0
        %348 = vmatprep.subr.mxu0 0.0
        %349 = vmatpush1.msra.mxu0 0.0
        %350 = vmatprep.subr.mxu0 0.0
        %351 = vmatpush1.msra.mxu0 0.0
        %352 = vmatprep.subr.mxu0 0.0
        %353 = vmatpush1.msra.mxu0 0.0
        %354 = vmatprep.subr.mxu0 0.0
        %355 = vmatpush1.msra.mxu0 0.0
        %356 = vmatprep.subr.mxu0 0.0
        %357 = vmatpush1.msra.mxu0 0.0
        %358 = vmatprep.subr.mxu0 0.0
        %359 = vmatpush1.msra.mxu0 0.0
        %360 = vmatprep.subr.mxu0 0.0
        %361 = vmatpush1.msra.mxu0 0.0
        %362 = vmatprep.subr.mxu0 0.0
        %363 = vmatpush1.msra.mxu0 0.0
        %364 = vmatprep.subr.mxu0 0.0
        %365 = vmatpush1.msra.mxu0 0.0
        %366 = vmatprep.subr.mxu0 0.0
        %367 = vmatpush1.msra.mxu0 0.0
        %368 = vmatprep.subr.mxu0 0.0
        %369 = vmatpush1.msra.mxu0 0.0
        %370 = vmatprep.subr.mxu0 0.0
        %371 = vmatpush1.msra.mxu0 0.0
        %372 = vmatprep.subr.mxu0 0.0
        %373 = vmatpush1.msra.mxu0 0.0
        %374 = vmatprep.subr.mxu0 0.0
        %375 = vmatpush1.msra.mxu0 0.0
        %376 = vmatprep.subr.mxu0 0.0
        %377 = vmatpush1.msra.mxu0 0.0
        %378 = vmatprep.subr.mxu0 0.0
        %379 = vmatpush1.msra.mxu0 0.0
        %380 = vmatprep.subr.mxu0 0.0
        %381 = vmatpush1.msra.mxu0 0.0
        %382 = vmatprep.subr.mxu0 0.0
        %383 = vmatpush1.msra.mxu0 0.0
        %384 = vmatprep.subr.mxu0 0.0
        %385 = vmatpush1.msra.mxu0 0.0
        %386 = vmatprep.subr.mxu0 0.0
        %387 = vmatpush1.msra.mxu0 0.0
        %388 = vmatprep.mubr.f32.mxu0 0.0
        %389 = vmatmul.mubr.f32.gmra.mrb[0].mxu0 %v318
        %v390 = vpop.f32.mrb[0].mxu0
        %v391 = vadd.f32 %v314, %v390
        %v392 = vpop.f32.mrb[0].mxu0
        %393 = vdwg.mxu0
        %v394 = vrot.slane %v391, 4
        %v395 = vadd.f32 %v391, %v394
        %v396 = vrot.slane %v395, 2
        %v397 = vadd.f32 %v395, %v396
        %v398 = vrot.slane %v397, 1
        %v399 = vadd.f32 %v397, %v398
        %v400 = vmul.f32 %v391, %v391
        %v401 = vrot.slane %v400, 4
        %v402 = vadd.f32 %v400, %v401
        %v403 = vrot.slane %v402, 2
        %v404 = vadd.f32 %v402, %v403
        %v405 = vrot.slane %v404, 1
        %v406 = vadd.f32 %v404, %v405
        %v407 = vlaneseq
        %v408 = vshrl.u32 %v407, 7
        %vm409 = vcmp.eq.s32.totalorder %v408, 0
        %v410 = vsel %vm409, %v399, %v406
        %v411 = vlaneseq
        %v412 = vand.u32 %v411, 127
        %s413 = smul.u32 %s26, 128
        %v414 = vstv %s413
        %v415 = vadd.s32 %v412, %v414
        %vm416 = vcmp.lt.s32.totalorder %v415, 256
        %v417 = vsel %vm416, 1, 0
        %v418 = vcvt.s32.f32 %v417
        %v419 = vmul.f32 %v410, %v418
        %420 = vrot.lane.b32.xlu0 %v419, 1
        %v421 = vpop.permute.xlu0 %420
        %vm422 = vcmp.ge.s32.totalorder %v412, 1
        %v423 = vsel %vm422, 1, 0
        %v424 = vcvt.s32.f32 %v423
        %v425 = vmul.f32 %v421, %v424
        %v426 = vadd.f32 %v419, %v425
        %427 = vrot.lane.b32.xlu0 %v426, 2
        %v428 = vpop.permute.xlu0 %427
        %vm429 = vcmp.ge.s32.totalorder %v412, 2
        %v430 = vsel %vm429, 1, 0
        %v431 = vcvt.s32.f32 %v430
        %v432 = vmul.f32 %v428, %v431
        %v433 = vadd.f32 %v426, %v432
        %434 = vrot.lane.b32.xlu0 %v433, 4
        %v435 = vpop.permute.xlu0 %434
        %vm436 = vcmp.ge.s32.totalorder %v412, 4
        %v437 = vsel %vm436, 1, 0
        %v438 = vcvt.s32.f32 %v437
        %v439 = vmul.f32 %v435, %v438
        %v440 = vadd.f32 %v433, %v439
        %441 = vrot.lane.b32.xlu0 %v440, 8
        %v442 = vpop.permute.xlu0 %441
        %vm443 = vcmp.ge.s32.totalorder %v412, 8
        %v444 = vsel %vm443, 1, 0
        %v445 = vcvt.s32.f32 %v444
        %v446 = vmul.f32 %v442, %v445
        %v447 = vadd.f32 %v440, %v446
        %448 = vrot.lane.b32.xlu0 %v447, 16
        %v449 = vpop.permute.xlu0 %448
        %vm450 = vcmp.ge.s32.totalorder %v412, 16
        %v451 = vsel %vm450, 1, 0
        %v452 = vcvt.s32.f32 %v451
        %v453 = vmul.f32 %v449, %v452
        %v454 = vadd.f32 %v447, %v453
        %455 = vrot.lane.b32.xlu0 %v454, 32
        %v456 = vpop.permute.xlu0 %455
        %vm457 = vcmp.ge.s32.totalorder %v412, 32
        %v458 = vsel %vm457, 1, 0
        %v459 = vcvt.s32.f32 %v458
        %v460 = vmul.f32 %v456, %v459
        %v461 = vadd.f32 %v454, %v460
        %462 = vrot.lane.b32.xlu0 %v461, 64
        %v463 = vpop.permute.xlu0 %462
        %vm464 = vcmp.ge.s32.totalorder %v412, 64
        %v465 = vsel %vm464, 1, 0
        %v466 = vcvt.s32.f32 %v465
        %v467 = vmul.f32 %v463, %v466
        %v468 = vadd.f32 %v461, %v467
        %v469 = vld [vmem:[#allocation2] sm:$0x3]
        %471 = vset.pattern.permute.xlu0 0
        %472 = vperm.xlu0 %471, %v469
        %v473 = vpop.permute.xlu0 %472
        %v475 = vadd.f32 %v468, %v473
        %477 = vrot.lane.b32.xlu0 %v475, 1
        %v478 = vpop.permute.xlu0 %477
        %vm480 = vcmask 1024
        %481 = vst.msk [vmem:[#allocation2] sm:$0x3] %vm480, %v478
        %v482 = vadd.s32 %v415, 1
        %v483 = vcvt.s32.f32 %v482
        %v484 = vmul.f32 %v483, 8.0
        %v485 = vrcp.pop %v484
        %v486 = vmul.f32 1.0, %v485
        %v487 = vmul.f32 %v475, %v486
        %v488 = vmul.f32 %v487, %v487
        %v490 = vrot.slane %v488, 7
        %v492 = vsub.f32 %v487, %v490
        %v493 = vmax.f32 %v492, 0.0
        %v494 = vrsqrt.pop %v493
        %v495 = vmul.f32 %v493, %v494
        %vm496 = vcmp.eq.f32.partialorder %v493, inf
        %v497 = vsel %vm496, %v493, %v495
        %vm498 = vcmp.eq.f32.partialorder %v493, 0.0
        %v499 = vand.u32 %v493, 2147483648
        %v500 = vsel %vm498, %v499, %v497
        %v501 = vadd.f32 %v500, 1e-12
        %v502 = vrcp.pop %v501
        %v503 = vmul.f32 1.0, %v502
        %v504 = vlaneseq
        %v505 = vshrl.u32 %v504, 7
        %v506 = vsub.s32 0, %v505
        %v507 = vrot.slane %v487, %v506
        %v508 = vsub.f32 %v391, %v507
        %v509 = vlaneseq
        %v510 = vshrl.u32 %v509, 7
        %v511 = vsub.s32 1, %v510
        %v512 = vrot.slane %v503, %v511
        %v513 = vmul.f32 %v508, %v512
        %v514 = vld [vmem:[%s3] sm:$0xff]
        %516 = vset.pattern.permute.xlu0 0
        %517 = vperm.xlu0 %516, %v514
        %v518 = vpop.permute.xlu0 %517
        %v520 = vmul.f32 %v513, %v518
        %v521 = vld [vmem:[%s4] sm:$0xff]
        %523 = vset.pattern.permute.xlu0 0
        %524 = vperm.xlu0 %523, %v521
        %v525 = vpop.permute.xlu0 %524
        %v527 = vadd.f32 %v520, %v525
        %v528 = vld [vmem:[%s5] sm:$0xff]
        %v529 = vld [vmem:[%s6] sm:$0xff]
        %531 = vset.pattern.permute.xlu0 0
        %532 = vperm.xlu0 %531, %v529
        %v533 = vpop.permute.xlu0 %532
        %vm535 = vcmask 64512
        %v537 = vsel %vm535, %v528, 0
        %539 = vmatprep.subr.mxu0 0.0
        %540 = vmatpush1.msra.mxu0 %v527
        %541 = vmatprep.subr.mxu0 0.0
        %542 = vmatpush1.msra.mxu0 0.0
        %543 = vmatprep.subr.mxu0 0.0
        %544 = vmatpush1.msra.mxu0 0.0
        %545 = vmatprep.subr.mxu0 0.0
        %546 = vmatpush1.msra.mxu0 0.0
        %547 = vmatprep.subr.mxu0 0.0
        %548 = vmatpush1.msra.mxu0 0.0
        %549 = vmatprep.subr.mxu0 0.0
        %550 = vmatpush1.msra.mxu0 0.0
        %551 = vmatprep.subr.mxu0 0.0
        %552 = vmatpush1.msra.mxu0 0.0
        %553 = vmatprep.subr.mxu0 0.0
        %554 = vmatpush1.msra.mxu0 0.0
        %555 = vmatprep.subr.mxu0 0.0
        %556 = vmatpush1.msra.mxu0 0.0
        %557 = vmatprep.subr.mxu0 0.0
        %558 = vmatpush1.msra.mxu0 0.0
        %559 = vmatprep.subr.mxu0 0.0
        %560 = vmatpush1.msra.mxu0 0.0
        %561 = vmatprep.subr.mxu0 0.0
        %562 = vmatpush1.msra.mxu0 0.0
        %563 = vmatprep.subr.mxu0 0.0
        %564 = vmatpush1.msra.mxu0 0.0
        %565 = vmatprep.subr.mxu0 0.0
        %566 = vmatpush1.msra.mxu0 0.0
        %567 = vmatprep.subr.mxu0 0.0
        %568 = vmatpush1.msra.mxu0 0.0
        %569 = vmatprep.subr.mxu0 0.0
        %570 = vmatpush1.msra.mxu0 0.0
        %571 = vmatprep.subr.mxu0 0.0
        %572 = vmatpush1.msra.mxu0 0.0
        %573 = vmatprep.subr.mxu0 0.0
        %574 = vmatpush1.msra.mxu0 0.0
        %575 = vmatprep.subr.mxu0 0.0
        %576 = vmatpush1.msra.mxu0 0.0
        %577 = vmatprep.subr.mxu0 0.0
        %578 = vmatpush1.msra.mxu0 0.0
        %579 = vmatprep.subr.mxu0 0.0
        %580 = vmatpush1.msra.mxu0 0.0
        %581 = vmatprep.subr.mxu0 0.0
        %582 = vmatpush1.msra.mxu0 0.0
        %583 = vmatprep.subr.mxu0 0.0
        %584 = vmatpush1.msra.mxu0 0.0
        %585 = vmatprep.subr.mxu0 0.0
        %586 = vmatpush1.msra.mxu0 0.0
        %587 = vmatprep.subr.mxu0 0.0
        %588 = vmatpush1.msra.mxu0 0.0
        %589 = vmatprep.subr.mxu0 0.0
        %590 = vmatpush1.msra.mxu0 0.0
        %591 = vmatprep.subr.mxu0 0.0
        %592 = vmatpush1.msra.mxu0 0.0
        %593 = vmatprep.subr.mxu0 0.0
        %594 = vmatpush1.msra.mxu0 0.0
        %595 = vmatprep.subr.mxu0 0.0
        %596 = vmatpush1.msra.mxu0 0.0
        %597 = vmatprep.subr.mxu0 0.0
        %598 = vmatpush1.msra.mxu0 0.0
        %599 = vmatprep.subr.mxu0 0.0
        %600 = vmatpush1.msra.mxu0 0.0
        %601 = vmatprep.subr.mxu0 0.0
        %602 = vmatpush1.msra.mxu0 0.0
        %603 = vmatprep.mubr.f32.mxu0 0.0
        %604 = vmatmul.mubr.f32.gmra.mrb[0].mxu0 %v537
        %v605 = vpop.f32.mrb[0].mxu0
        %v606 = vadd.f32 %v533, %v605
        %v607 = vpop.f32.mrb[0].mxu0
        %608 = vdwg.mxu0
        %v609 = vrot.slane %v606, 4
        %v610 = vmax.f32 %v606, %v609
        %v611 = vrot.slane %v610, 2
        %v612 = vmax.f32 %v610, %v611
        %v613 = vrot.slane %v612, 1
        %v614 = vmax.f32 %v612, %v613
        %v615 = vsub.f32 %v606, %v614
        %v616 = vmul.f32 %v615, 1.442695
        %v617 = vpow.pop %v616
        %v618 = vrot.slane %v617, 4
        %v619 = vadd.f32 %v617, %v618
        %v620 = vrot.slane %v619, 2
        %v621 = vadd.f32 %v619, %v620
        %v622 = vrot.slane %v621, 1
        %v623 = vadd.f32 %v621, %v622
        %v624 = vrcp.pop %v623
        %v625 = vmul.f32 %v617, %v624
        %626 = vst [vmem:[%s293] sm:$0xff] %v625
        %s627 = sand.u32 %s197, 1
        %s628 = scalar_lea.sflag [#allocation4], %s627
        %s629 = sand.u32 %s197, 1
        %s630 = smul.addr %s629, 8
        %s631 = scalar_lea.vmem [#allocation3], %s630
        // Predicated region
        $region53: #{tpu_custom_call.1} parent=47 // pred_check
          %p632 = pneg %p207
        $region54: #{tpu_custom_call.1} parent=47 // pred_check_branch
          %634 = sbr.rel (%p632) target = $region56
        $region55: #{tpu_custom_call.1} parent=47 // pred_region
          %s636 = ssub.s32 128, 128
          %637 = vsyncadd %s628, %s636
          %s638 = smul.addr %s25, 2
          %s639 = sadd.s32 %s26, %s638
          %s640 = smul.addr %s639, 128
          %s641 = scalar_lea.hbm %s7, %s640
          %s643 = sshll.u32 %s631, 4
          %s644 = int_to_ptr.vmem [resolvable:$true] %s643
          %646 = dma.vmem_to_hbm [thread:$0]  %s644, 128, %s641, %s628
        $region56: #{tpu_custom_call.1} parent=47 // pred_fallthru
          _
      $region48: #{tpu_custom_call.1} parent=5 // pred_fallthru
        _
      %p647 = scmp.le.s32.totalorder 2, %s16
      // Predicated region
      $region57: #{tpu_custom_call.1} parent=5 // pred_check
        %p648 = pneg %p647
      $region58: #{tpu_custom_call.1} parent=5 // pred_check_branch
        %650 = sbr.rel (%p648) target = $region60
      $region59: #{tpu_custom_call.1} parent=5 // pred_region
        %s651 = ssub.s32 %s16, 2
        // Predicated region
        $region61: #{tpu_custom_call.1} parent=59 // pred_check
          %p652 = pneg %p213
        $region62: #{tpu_custom_call.1} parent=59 // pred_check_branch
          %654 = sbr.rel (%p652) target = $region64
        $region63: #{tpu_custom_call.1} parent=59 // pred_region
          %s655 = sand.u32 %s198, 1
          %s656 = scalar_lea.sflag [#allocation4], %s655
          %s657 = sand.u32 %s198, 1
          %s658 = smul.addr %s657, 8
          %s659 = scalar_lea.vmem [#allocation3], %s658
          %660 = dma.done %s656, 128
        $region64: #{tpu_custom_call.1} parent=59 // pred_fallthru
          _
      $region60: #{tpu_custom_call.1} parent=5 // pred_fallthru
        _
    $region6: #{tpu_custom_call.1} parent=1 // loop_footer
      %s20 = sadd.s32 1, %s16
    $region7: #{tpu_custom_call.1} parent=1 // loop_footer_branch
      %15 = sbr.rel target = $region3
    $region8: #{tpu_custom_call.1} parent=1 // loop_exit
      _
    %661 = vsyncpa [#allocation4], 1
    %s662 = scalar_lea.sflag [#allocation4], 1
    %663 = vsyncpa %s662, 1

</llo_original>
